<compile_context>
chip_gen: v5e
topology: v5e:2x2
jax: 0.10.0
libtpu: 0.0.40
codegen_flags: <defaults>
</compile_context>

<pallas_src>
import jax
import jax.numpy as jnp
from jax.experimental import pallas as pl
from jax.experimental.pallas import tpu as pltpu


def _graph_pool_kernel(i0_ref, i1_ref, x_ref, out_ref, acc_ref):
    """One (edge-block, vertex-block) grid step.

    i0_ref, i1_ref : VMEM (TE, 1) int32   -- endpoint indices for this edge block
    x_ref          : VMEM (TN, F) float   -- one vertex-feature block
    out_ref        : VMEM (TE, F) float   -- midpoints for this edge block
    acc_ref        : VMEM (TE, F) float32 -- accumulator across vertex blocks
    """
    nb = pl.program_id(1)

    @pl.when(nb == 0)
    def _():
        acc_ref[...] = jnp.zeros_like(acc_ref)

    te = out_ref.shape[0]
    tn = x_ref.shape[0]

    # Global vertex (column) ids covered by this vertex block.
    cols = nb * tn + jax.lax.broadcasted_iota(jnp.int32, (te, tn), 1)
    i0 = i0_ref[...]  # (TE, 1), broadcasts along lanes
    i1 = i1_ref[...]  # (TE, 1)

    # Selection matrix: 0.5 at each endpoint column; self-loops sum to 1.0.
    sel = 0.5 * ((cols == i0).astype(jnp.float32) + (cols == i1).astype(jnp.float32))

    # Gather + average as a single MXU matmul, accumulated over vertex blocks.
    acc_ref[...] += jnp.dot(
        sel, x_ref[...].astype(jnp.float32), preferred_element_type=jnp.float32
    )

    @pl.when(nb == pl.num_programs(1) - 1)
    def _():
        out_ref[...] = acc_ref[...].astype(out_ref.dtype)


def graph_pooling(x, pool_idx, *, edge_block=128, vert_block=128):
    """x: (N, F) float, pool_idx: (E, 2) int. Returns (N + E, F)."""
    n, f = x.shape
    e = pool_idx.shape[0]

    e_pad = pl.cdiv(e, edge_block) * edge_block
    n_pad = pl.cdiv(n, vert_block) * vert_block

    # Pad vertices with zero rows (never selected: all indices < n) and edges
    # with index 0 (valid index; padded output rows are sliced off below).
    x_p = jnp.pad(x, ((0, n_pad - n), (0, 0)))
    idx_p = jnp.pad(pool_idx.astype(jnp.int32), ((0, e_pad - e), (0, 0)))
    i0 = idx_p[:, 0:1]  # (E_pad, 1)
    i1 = idx_p[:, 1:2]  # (E_pad, 1)

    grid = (e_pad // edge_block, n_pad // vert_block)

    new_vertices = pl.pallas_call(
        _graph_pool_kernel,
        out_shape=jax.ShapeDtypeStruct((e_pad, f), x.dtype),
        grid_spec=pltpu.PrefetchScalarGridSpec(
            num_scalar_prefetch=0,
            grid=grid,
            in_specs=[
                pl.BlockSpec((edge_block, 1), lambda eb, nb: (eb, 0)),
                pl.BlockSpec((edge_block, 1), lambda eb, nb: (eb, 0)),
                pl.BlockSpec((vert_block, f), lambda eb, nb: (nb, 0)),
            ],
            out_specs=pl.BlockSpec((edge_block, f), lambda eb, nb: (eb, 0)),
            scratch_shapes=[pltpu.VMEM((edge_block, f), jnp.float32)],
        ),
        compiler_params=pltpu.CompilerParams(
            dimension_semantics=("parallel", "arbitrary"),
        ),
    )(i0, i1, x_p)

    # TODO(synk): fuse the concatenation into the kernel output (write the
    # midpoints directly into rows [N, N+E) of a single (N+E, F) buffer) to
    # save one extra HBM round-trip over x.
    return jnp.concatenate([x, new_vertices[:e]], axis=0)


if __name__ == "__main__":
    key = jax.random.PRNGKey(0)
    k_x, k_idx = jax.random.split(key)

    N, F, E = 16, 32, 24  # small shapes: 16 vertices, 32 features, 24 edges
    x = jax.random.normal(k_x, (N, F), dtype=jnp.float32)
    pool_idx = jax.random.randint(k_idx, (E, 2), 0, N, dtype=jnp.int32)

    out = graph_pooling(x, pool_idx)
    out = jax.block_until_ready(out)

    # Pure-JAX reference of the PyTorch forward.
    ref_new = 0.5 * (x[pool_idx[:, 0]] + x[pool_idx[:, 1]])
    ref = jnp.concatenate([x, ref_new], axis=0)

    assert out.shape == (N + E, F)
    assert jnp.allclose(out, ref, atol=1e-6, rtol=1e-6)
    print("KERNEL_OK")
</pallas_src>

<mosaic_0001>
module attributes {stable_mosaic.version = 11 : i64} {
  func.func @_graph_pool_kernel(%arg0: i32, %arg1: i32, %arg2: memref<128x1xi32, #tpu.memory_space<vmem>>, %arg3: memref<128x1xi32, #tpu.memory_space<vmem>>, %arg4: memref<128x32xf32, #tpu.memory_space<vmem>>, %arg5: memref<128x32xf32, #tpu.memory_space<vmem>>, %arg6: memref<128x32xf32, #tpu.memory_space<vmem>>) attributes {dimension_semantics = [#tpu.dimension_semantics<parallel>, #tpu.dimension_semantics<arbitrary>], iteration_bounds = array<i64: 1, 1>, scalar_prefetch = 0 : i64, scratch_operands = 1 : i64, tpu.core_type = #tpu.core_type<tc>, window_params = [{transform_indices = @transform_0, window_bounds = array<i64: 128, 1>}, {transform_indices = @transform_1, window_bounds = array<i64: 128, 1>}, {transform_indices = @transform_2, window_bounds = array<i64: 128, 32>}, {transform_indices = @transform_3, window_bounds = array<i64: 128, 32>}]} {
    %c0_i32 = arith.constant 0 : i32
    %0 = arith.cmpi eq, %arg1, %c0_i32 : i32
    %1 = arith.extui %0 : i1 to i32
    %c0_i32_0 = arith.constant 0 : i32
    %2 = arith.cmpi ne, %1, %c0_i32_0 : i32
    scf.if %2 {
      %cst_13 = arith.constant 0.000000e+00 : f32
      %28 = vector.broadcast %cst_13 : f32 to vector<128x32xf32>
      %c0_14 = arith.constant 0 : index
      %c0_15 = arith.constant 0 : index
      %29 = vector.load %arg6[%c0_14, %c0_15] : memref<128x32xf32, #tpu.memory_space<vmem>>, vector<128x32xf32>
      tpu.vector_store %arg6[%c0_14, %c0_15], %28 {strides = array<i32>} : memref<128x32xf32, #tpu.memory_space<vmem>>, vector<128x32xf32>,
    } else {
    }
    %c128_i32 = arith.constant 128 : i32
    %3 = arith.muli %arg1, %c128_i32 : i32
    %4 = tpu.iota {dimensions = array<i32: 1>} : vector<128x128xi32>
    %5 = vector.broadcast %3 : i32 to vector<128x128xi32>
    %6 = arith.addi %5, %4 : vector<128x128xi32>
    %c0 = arith.constant 0 : index
    %c0_1 = arith.constant 0 : index
    %7 = vector.load %arg2[%c0, %c0_1] : memref<128x1xi32, #tpu.memory_space<vmem>>, vector<128x1xi32>
    %c0_2 = arith.constant 0 : index
    %c0_3 = arith.constant 0 : index
    %8 = vector.load %arg3[%c0_2, %c0_3] : memref<128x1xi32, #tpu.memory_space<vmem>>, vector<128x1xi32>
    %9 = vector.broadcast %7 : vector<128x1xi32> to vector<128x128xi32>
    %10 = arith.cmpi eq, %6, %9 : vector<128x128xi32>
    %11 = arith.extui %10 : vector<128x128xi1> to vector<128x128xi32>
    %12 = arith.sitofp %11 : vector<128x128xi32> to vector<128x128xf32>
    %13 = vector.broadcast %8 : vector<128x1xi32> to vector<128x128xi32>
    %14 = arith.cmpi eq, %6, %13 : vector<128x128xi32>
    %15 = arith.extui %14 : vector<128x128xi1> to vector<128x128xi32>
    %16 = arith.sitofp %15 : vector<128x128xi32> to vector<128x128xf32>
    %17 = arith.addf %12, %16 : vector<128x128xf32>
    %cst = arith.constant 5.000000e-01 : f32
    %18 = vector.broadcast %cst : f32 to vector<128x128xf32>
    %19 = arith.mulf %18, %17 : vector<128x128xf32>
    %c0_4 = arith.constant 0 : index
    %c0_5 = arith.constant 0 : index
    %20 = vector.load %arg6[%c0_4, %c0_5] : memref<128x32xf32, #tpu.memory_space<vmem>>, vector<128x32xf32>
    %c0_6 = arith.constant 0 : index
    %c0_7 = arith.constant 0 : index
    %21 = vector.load %arg4[%c0_6, %c0_7] : memref<128x32xf32, #tpu.memory_space<vmem>>, vector<128x32xf32>
    %cst_8 = arith.constant dense<0.000000e+00> : vector<128x32xf32>
    %22 = tpu.matmul %19, %21, %cst_8 {dimension_numbers = #tpu.dot_dimension_numbers<[1], [0], [0], [1], [0, 0, 1, 1], [], []>} : vector<128x128xf32>, vector<128x32xf32>, vector<128x32xf32> -> vector<128x32xf32>
    %23 = arith.addf %20, %22 : vector<128x32xf32>
    %c0_9 = arith.constant 0 : index
    %c0_10 = arith.constant 0 : index
    %24 = vector.load %arg6[%c0_9, %c0_10] : memref<128x32xf32, #tpu.memory_space<vmem>>, vector<128x32xf32>
    tpu.vector_store %arg6[%c0_9, %c0_10], %23 {strides = array<i32>} : memref<128x32xf32, #tpu.memory_space<vmem>>, vector<128x32xf32>,
    %c0_i32_11 = arith.constant 0 : i32
    %25 = arith.cmpi eq, %arg1, %c0_i32_11 : i32
    %26 = arith.extui %25 : i1 to i32
    %c0_i32_12 = arith.constant 0 : i32
    %27 = arith.cmpi ne, %26, %c0_i32_12 : i32
    scf.if %27 {
      %c0_13 = arith.constant 0 : index
      %c0_14 = arith.constant 0 : index
      %28 = vector.load %arg6[%c0_13, %c0_14] : memref<128x32xf32, #tpu.memory_space<vmem>>, vector<128x32xf32>
      %c0_15 = arith.constant 0 : index
      %c0_16 = arith.constant 0 : index
      %29 = vector.load %arg5[%c0_15, %c0_16] : memref<128x32xf32, #tpu.memory_space<vmem>>, vector<128x32xf32>
      tpu.vector_store %arg5[%c0_15, %c0_16], %28 {strides = array<i32>} : memref<128x32xf32, #tpu.memory_space<vmem>>, vector<128x32xf32>,
    } else {
    }
    return
  }
  func.func @transform_0(%arg0: i32, %arg1: i32) -> (i32, i32) {
    %c0_i32 = arith.constant 0 : i32
    %c0_i32_0 = arith.constant 0 : i32
    return %arg0, %c0_i32 : i32, i32
  }
  func.func @transform_1(%arg0: i32, %arg1: i32) -> (i32, i32) {
    %c0_i32 = arith.constant 0 : i32
    %c0_i32_0 = arith.constant 0 : i32
    return %arg0, %c0_i32 : i32, i32
  }
  func.func @transform_2(%arg0: i32, %arg1: i32) -> (i32, i32) {
    %c0_i32 = arith.constant 0 : i32
    %c0_i32_0 = arith.constant 0 : i32
    return %arg1, %c0_i32 : i32, i32
  }
  func.func @transform_3(%arg0: i32, %arg1: i32) -> (i32, i32) {
    %c0_i32 = arith.constant 0 : i32
    %c0_i32_0 = arith.constant 0 : i32
    return %arg0, %c0_i32 : i32, i32
  }
}

</mosaic_0001>

<llo_original>
// kernel: tpu_custom_call.1
$region0: #{tpu_custom_call.1}
  #allocation0 [shape = 'u32[]', space=smem, size = 0x4, offset = 0x4, fixed_abs, tag = 'smem constant byte address 0x4 - core index']
  #allocation1 [shape = 'u32[72,128]{1,0:T(1,128)}', space=vmem, size = 0x9000, scoped, tag = 'internal scratch']
  #allocation2 [shape = 'f32[128,32]{1,0:T(8,128)}', space=vmem, size = 0x10000, scoped, tag = 'scratch operand']
  %s0 = inlined_call_operand.vmem [shape: s32[128,1], index: 0, kind: input, shape index: {}]
  %s1 = inlined_call_operand.vmem [shape: s32[128,1], index: 1, kind: input, shape index: {}]
  %s2 = inlined_call_operand.vmem [shape: f32[128,32], index: 2, kind: input, shape index: {}]
  %s3 = inlined_call_operand.vmem [shape: f32[128,32], index: 3, kind: output, shape index: {}]
  %s4 = sld [smem:[#allocation0]]
  $region30: #{tpu_custom_call.1} parent=0
    _
  %s6 = ssub.s32 1, %s4
  %s7 = scalar_select 0, %s6, %s4
  // Predicated region
  $region2: #{tpu_custom_call.1} parent=0 // pred_check
    _
  $region3: #{tpu_custom_call.1} parent=0 // pred_check_branch
    %9 = sbr.rel (0) target = $region5
  $region4: #{tpu_custom_call.1} parent=0 // pred_region
    _
  $region5: #{tpu_custom_call.1} parent=0 // pred_fallthru
    _
  // Predicated region
  $region6: #{tpu_custom_call.1} parent=0 // pred_check
    _
  $region7: #{tpu_custom_call.1} parent=0 // pred_check_branch
    %11 = sbr.rel (0) target = $region9
  $region8: #{tpu_custom_call.1} parent=0 // pred_region
    _
  $region9: #{tpu_custom_call.1} parent=0 // pred_fallthru
    _
  // Predicated region
  $region10: #{tpu_custom_call.1} parent=0 // pred_check
    _
  $region11: #{tpu_custom_call.1} parent=0 // pred_check_branch
    %13 = sbr.rel (0) target = $region13
  $region12: #{tpu_custom_call.1} parent=0 // pred_region
    _
  $region13: #{tpu_custom_call.1} parent=0 // pred_fallthru
    _
  %p14 = scmp.eq.s32.totalorder 0, 0
  // Predicated region
  $region14: #{tpu_custom_call.1} parent=0 // pred_check
    %p15 = pneg %p14
  $region15: #{tpu_custom_call.1} parent=0 // pred_check_branch
    %17 = sbr.rel (%p15) target = $region17
  $region16: #{tpu_custom_call.1} parent=0 // pred_region
    %vm18 = vcmask 261120
    %19 = vst.msk [vmem:[#allocation2] sm:$0xff] %vm18, 0.0
    %20 = vst.msk [vmem:[#allocation2 + $0x8] sm:$0xff] %vm18, 0.0
    %21 = vst.msk [vmem:[#allocation2 + $0x10] sm:$0xff] %vm18, 0.0
    %22 = vst.msk [vmem:[#allocation2 + $0x18] sm:$0xff] %vm18, 0.0
    %23 = vst.msk [vmem:[#allocation2 + $0x20] sm:$0xff] %vm18, 0.0
    %24 = vst.msk [vmem:[#allocation2 + $0x28] sm:$0xff] %vm18, 0.0
    %25 = vst.msk [vmem:[#allocation2 + $0x30] sm:$0xff] %vm18, 0.0
    %26 = vst.msk [vmem:[#allocation2 + $0x38] sm:$0xff] %vm18, 0.0
    %27 = vst.msk [vmem:[#allocation2 + $0x40] sm:$0xff] %vm18, 0.0
    %28 = vst.msk [vmem:[#allocation2 + $0x48] sm:$0xff] %vm18, 0.0
    %29 = vst.msk [vmem:[#allocation2 + $0x50] sm:$0xff] %vm18, 0.0
    %30 = vst.msk [vmem:[#allocation2 + $0x58] sm:$0xff] %vm18, 0.0
    %31 = vst.msk [vmem:[#allocation2 + $0x60] sm:$0xff] %vm18, 0.0
    %32 = vst.msk [vmem:[#allocation2 + $0x68] sm:$0xff] %vm18, 0.0
    %33 = vst.msk [vmem:[#allocation2 + $0x70] sm:$0xff] %vm18, 0.0
    %34 = vst.msk [vmem:[#allocation2 + $0x78] sm:$0xff] %vm18, 0.0
  $region17: #{tpu_custom_call.1} parent=0 // pred_fallthru
    _
  %s35 = smul.u32 0, 128
  %v36 = vlaneseq
  %v37 = vand.u32 %v36, 127
  %v38 = vstv %s35
  %v39 = vadd.s32 %v38, %v37
  %v40 = vld [vmem:[%s0] sm:$0xff]
  %v41 = vld [vmem:[%s0 + $0x8] sm:$0xff]
  %v42 = vld [vmem:[%s0 + $0x10] sm:$0xff]
  %v43 = vld [vmem:[%s0 + $0x18] sm:$0xff]
  %v44 = vld [vmem:[%s0 + $0x20] sm:$0xff]
  %v45 = vld [vmem:[%s0 + $0x28] sm:$0xff]
  %v46 = vld [vmem:[%s0 + $0x30] sm:$0xff]
  %v47 = vld [vmem:[%s0 + $0x38] sm:$0xff]
  %v48 = vld [vmem:[%s0 + $0x40] sm:$0xff]
  %v49 = vld [vmem:[%s0 + $0x48] sm:$0xff]
  %v50 = vld [vmem:[%s0 + $0x50] sm:$0xff]
  %v51 = vld [vmem:[%s0 + $0x58] sm:$0xff]
  %v52 = vld [vmem:[%s0 + $0x60] sm:$0xff]
  %v53 = vld [vmem:[%s0 + $0x68] sm:$0xff]
  %v54 = vld [vmem:[%s0 + $0x70] sm:$0xff]
  %v55 = vld [vmem:[%s0 + $0x78] sm:$0xff]
  %v56 = vld [vmem:[%s1] sm:$0xff]
  %v57 = vld [vmem:[%s1 + $0x8] sm:$0xff]
  %v58 = vld [vmem:[%s1 + $0x10] sm:$0xff]
  %v59 = vld [vmem:[%s1 + $0x18] sm:$0xff]
  %v60 = vld [vmem:[%s1 + $0x20] sm:$0xff]
  %v61 = vld [vmem:[%s1 + $0x28] sm:$0xff]
  %v62 = vld [vmem:[%s1 + $0x30] sm:$0xff]
  %v63 = vld [vmem:[%s1 + $0x38] sm:$0xff]
  %v64 = vld [vmem:[%s1 + $0x40] sm:$0xff]
  %v65 = vld [vmem:[%s1 + $0x48] sm:$0xff]
  %v66 = vld [vmem:[%s1 + $0x50] sm:$0xff]
  %v67 = vld [vmem:[%s1 + $0x58] sm:$0xff]
  %v68 = vld [vmem:[%s1 + $0x60] sm:$0xff]
  %v69 = vld [vmem:[%s1 + $0x68] sm:$0xff]
  %v70 = vld [vmem:[%s1 + $0x70] sm:$0xff]
  %v71 = vld [vmem:[%s1 + $0x78] sm:$0xff]
  %72 = vset.pattern.permute.xlu0 0
  %73 = vperm.xlu0 %72, %v40
  %v74 = vpop.permute.xlu0 %73
  %75 = vset.pattern.permute.xlu0 0
  %76 = vperm.xlu0 %75, %v41
  %v77 = vpop.permute.xlu0 %76
  %78 = vset.pattern.permute.xlu0 0
  %79 = vperm.xlu0 %78, %v42
  %v80 = vpop.permute.xlu0 %79
  %81 = vset.pattern.permute.xlu0 0
  %82 = vperm.xlu0 %81, %v43
  %v83 = vpop.permute.xlu0 %82
  %84 = vset.pattern.permute.xlu0 0
  %85 = vperm.xlu0 %84, %v44
  %v86 = vpop.permute.xlu0 %85
  %87 = vset.pattern.permute.xlu0 0
  %88 = vperm.xlu0 %87, %v45
  %v89 = vpop.permute.xlu0 %88
  %90 = vset.pattern.permute.xlu0 0
  %91 = vperm.xlu0 %90, %v46
  %v92 = vpop.permute.xlu0 %91
  %93 = vset.pattern.permute.xlu0 0
  %94 = vperm.xlu0 %93, %v47
  %v95 = vpop.permute.xlu0 %94
  %96 = vset.pattern.permute.xlu0 0
  %97 = vperm.xlu0 %96, %v48
  %v98 = vpop.permute.xlu0 %97
  %99 = vset.pattern.permute.xlu0 0
  %100 = vperm.xlu0 %99, %v49
  %v101 = vpop.permute.xlu0 %100
  %102 = vset.pattern.permute.xlu0 0
  %103 = vperm.xlu0 %102, %v50
  %v104 = vpop.permute.xlu0 %103
  %105 = vset.pattern.permute.xlu0 0
  %106 = vperm.xlu0 %105, %v51
  %v107 = vpop.permute.xlu0 %106
  %108 = vset.pattern.permute.xlu0 0
  %109 = vperm.xlu0 %108, %v52
  %v110 = vpop.permute.xlu0 %109
  %111 = vset.pattern.permute.xlu0 0
  %112 = vperm.xlu0 %111, %v53
  %v113 = vpop.permute.xlu0 %112
  %114 = vset.pattern.permute.xlu0 0
  %115 = vperm.xlu0 %114, %v54
  %v116 = vpop.permute.xlu0 %115
  %117 = vset.pattern.permute.xlu0 0
  %118 = vperm.xlu0 %117, %v55
  %v119 = vpop.permute.xlu0 %118
  %vm120 = vcmp.eq.s32.totalorder %v39, %v74
  %vm121 = vcmp.eq.s32.totalorder %v39, %v77
  %vm122 = vcmp.eq.s32.totalorder %v39, %v80
  %vm123 = vcmp.eq.s32.totalorder %v39, %v83
  %vm124 = vcmp.eq.s32.totalorder %v39, %v86
  %vm125 = vcmp.eq.s32.totalorder %v39, %v89
  %vm126 = vcmp.eq.s32.totalorder %v39, %v92
  %vm127 = vcmp.eq.s32.totalorder %v39, %v95
  %vm128 = vcmp.eq.s32.totalorder %v39, %v98
  %vm129 = vcmp.eq.s32.totalorder %v39, %v101
  %vm130 = vcmp.eq.s32.totalorder %v39, %v104
  %vm131 = vcmp.eq.s32.totalorder %v39, %v107
  %vm132 = vcmp.eq.s32.totalorder %v39, %v110
  %vm133 = vcmp.eq.s32.totalorder %v39, %v113
  %vm134 = vcmp.eq.s32.totalorder %v39, %v116
  %vm135 = vcmp.eq.s32.totalorder %v39, %v119
  %v136 = vsel %vm120, 1, 0
  %v137 = vsel %vm121, 1, 0
  %v138 = vsel %vm122, 1, 0
  %v139 = vsel %vm123, 1, 0
  %v140 = vsel %vm124, 1, 0
  %v141 = vsel %vm125, 1, 0
  %v142 = vsel %vm126, 1, 0
  %v143 = vsel %vm127, 1, 0
  %v144 = vsel %vm128, 1, 0
  %v145 = vsel %vm129, 1, 0
  %v146 = vsel %vm130, 1, 0
  %v147 = vsel %vm131, 1, 0
  %v148 = vsel %vm132, 1, 0
  %v149 = vsel %vm133, 1, 0
  %v150 = vsel %vm134, 1, 0
  %v151 = vsel %vm135, 1, 0
  %v152 = vcvt.s32.f32 %v136
  %v153 = vcvt.s32.f32 %v137
  %v154 = vcvt.s32.f32 %v138
  %v155 = vcvt.s32.f32 %v139
  %v156 = vcvt.s32.f32 %v140
  %v157 = vcvt.s32.f32 %v141
  %v158 = vcvt.s32.f32 %v142
  %v159 = vcvt.s32.f32 %v143
  %v160 = vcvt.s32.f32 %v144
  %v161 = vcvt.s32.f32 %v145
  %v162 = vcvt.s32.f32 %v146
  %v163 = vcvt.s32.f32 %v147
  %v164 = vcvt.s32.f32 %v148
  %v165 = vcvt.s32.f32 %v149
  %v166 = vcvt.s32.f32 %v150
  %v167 = vcvt.s32.f32 %v151
  %168 = vset.pattern.permute.xlu0 0
  %169 = vperm.xlu0 %168, %v56
  %v170 = vpop.permute.xlu0 %169
  %171 = vset.pattern.permute.xlu0 0
  %172 = vperm.xlu0 %171, %v57
  %v173 = vpop.permute.xlu0 %172
  %174 = vset.pattern.permute.xlu0 0
  %175 = vperm.xlu0 %174, %v58
  %v176 = vpop.permute.xlu0 %175
  %177 = vset.pattern.permute.xlu0 0
  %178 = vperm.xlu0 %177, %v59
  %v179 = vpop.permute.xlu0 %178
  %180 = vset.pattern.permute.xlu0 0
  %181 = vperm.xlu0 %180, %v60
  %v182 = vpop.permute.xlu0 %181
  %183 = vset.pattern.permute.xlu0 0
  %184 = vperm.xlu0 %183, %v61
  %v185 = vpop.permute.xlu0 %184
  %186 = vset.pattern.permute.xlu0 0
  %187 = vperm.xlu0 %186, %v62
  %v188 = vpop.permute.xlu0 %187
  %189 = vset.pattern.permute.xlu0 0
  %190 = vperm.xlu0 %189, %v63
  %v191 = vpop.permute.xlu0 %190
  %192 = vset.pattern.permute.xlu0 0
  %193 = vperm.xlu0 %192, %v64
  %v194 = vpop.permute.xlu0 %193
  %195 = vset.pattern.permute.xlu0 0
  %196 = vperm.xlu0 %195, %v65
  %v197 = vpop.permute.xlu0 %196
  %198 = vset.pattern.permute.xlu0 0
  %199 = vperm.xlu0 %198, %v66
  %v200 = vpop.permute.xlu0 %199
  %201 = vset.pattern.permute.xlu0 0
  %202 = vperm.xlu0 %201, %v67
  %v203 = vpop.permute.xlu0 %202
  %204 = vset.pattern.permute.xlu0 0
  %205 = vperm.xlu0 %204, %v68
  %v206 = vpop.permute.xlu0 %205
  %207 = vset.pattern.permute.xlu0 0
  %208 = vperm.xlu0 %207, %v69
  %v209 = vpop.permute.xlu0 %208
  %210 = vset.pattern.permute.xlu0 0
  %211 = vperm.xlu0 %210, %v70
  %v212 = vpop.permute.xlu0 %211
  %213 = vset.pattern.permute.xlu0 0
  %214 = vperm.xlu0 %213, %v71
  %v215 = vpop.permute.xlu0 %214
  %vm216 = vcmp.eq.s32.totalorder %v39, %v170
  %vm217 = vcmp.eq.s32.totalorder %v39, %v173
  %vm218 = vcmp.eq.s32.totalorder %v39, %v176
  %vm219 = vcmp.eq.s32.totalorder %v39, %v179
  %vm220 = vcmp.eq.s32.totalorder %v39, %v182
  %vm221 = vcmp.eq.s32.totalorder %v39, %v185
  %vm222 = vcmp.eq.s32.totalorder %v39, %v188
  %vm223 = vcmp.eq.s32.totalorder %v39, %v191
  %vm224 = vcmp.eq.s32.totalorder %v39, %v194
  %vm225 = vcmp.eq.s32.totalorder %v39, %v197
  %vm226 = vcmp.eq.s32.totalorder %v39, %v200
  %vm227 = vcmp.eq.s32.totalorder %v39, %v203
  %vm228 = vcmp.eq.s32.totalorder %v39, %v206
  %vm229 = vcmp.eq.s32.totalorder %v39, %v209
  %vm230 = vcmp.eq.s32.totalorder %v39, %v212
  %vm231 = vcmp.eq.s32.totalorder %v39, %v215
  %v232 = vsel %vm216, 1, 0
  %v233 = vsel %vm217, 1, 0
  %v234 = vsel %vm218, 1, 0
  %v235 = vsel %vm219, 1, 0
  %v236 = vsel %vm220, 1, 0
  %v237 = vsel %vm221, 1, 0
  %v238 = vsel %vm222, 1, 0
  %v239 = vsel %vm223, 1, 0
  %v240 = vsel %vm224, 1, 0
  %v241 = vsel %vm225, 1, 0
  %v242 = vsel %vm226, 1, 0
  %v243 = vsel %vm227, 1, 0
  %v244 = vsel %vm228, 1, 0
  %v245 = vsel %vm229, 1, 0
  %v246 = vsel %vm230, 1, 0
  %v247 = vsel %vm231, 1, 0
  %v248 = vcvt.s32.f32 %v232
  %v249 = vcvt.s32.f32 %v233
  %v250 = vcvt.s32.f32 %v234
  %v251 = vcvt.s32.f32 %v235
  %v252 = vcvt.s32.f32 %v236
  %v253 = vcvt.s32.f32 %v237
  %v254 = vcvt.s32.f32 %v238
  %v255 = vcvt.s32.f32 %v239
  %v256 = vcvt.s32.f32 %v240
  %v257 = vcvt.s32.f32 %v241
  %v258 = vcvt.s32.f32 %v242
  %v259 = vcvt.s32.f32 %v243
  %v260 = vcvt.s32.f32 %v244
  %v261 = vcvt.s32.f32 %v245
  %v262 = vcvt.s32.f32 %v246
  %v263 = vcvt.s32.f32 %v247
  %v264 = vadd.f32 %v152, %v248
  %v265 = vadd.f32 %v153, %v249
  %v266 = vadd.f32 %v154, %v250
  %v267 = vadd.f32 %v155, %v251
  %v268 = vadd.f32 %v156, %v252
  %v269 = vadd.f32 %v157, %v253
  %v270 = vadd.f32 %v158, %v254
  %v271 = vadd.f32 %v159, %v255
  %v272 = vadd.f32 %v160, %v256
  %v273 = vadd.f32 %v161, %v257
  %v274 = vadd.f32 %v162, %v258
  %v275 = vadd.f32 %v163, %v259
  %v276 = vadd.f32 %v164, %v260
  %v277 = vadd.f32 %v165, %v261
  %v278 = vadd.f32 %v166, %v262
  %v279 = vadd.f32 %v167, %v263
  %v280 = vmul.f32 %v264, 0.5
  %v281 = vmul.f32 %v265, 0.5
  %v282 = vmul.f32 %v266, 0.5
  %v283 = vmul.f32 %v267, 0.5
  %v284 = vmul.f32 %v268, 0.5
  %v285 = vmul.f32 %v269, 0.5
  %v286 = vmul.f32 %v270, 0.5
  %v287 = vmul.f32 %v271, 0.5
  %v288 = vmul.f32 %v272, 0.5
  %v289 = vmul.f32 %v273, 0.5
  %v290 = vmul.f32 %v274, 0.5
  %v291 = vmul.f32 %v275, 0.5
  %v292 = vmul.f32 %v276, 0.5
  %v293 = vmul.f32 %v277, 0.5
  %v294 = vmul.f32 %v278, 0.5
  %v295 = vmul.f32 %v279, 0.5
  %v296 = vld [vmem:[#allocation2] sm:$0xff]
  %v297 = vld [vmem:[#allocation2 + $0x8] sm:$0xff]
  %v298 = vld [vmem:[#allocation2 + $0x10] sm:$0xff]
  %v299 = vld [vmem:[#allocation2 + $0x18] sm:$0xff]
  %v300 = vld [vmem:[#allocation2 + $0x20] sm:$0xff]
  %v301 = vld [vmem:[#allocation2 + $0x28] sm:$0xff]
  %v302 = vld [vmem:[#allocation2 + $0x30] sm:$0xff]
  %v303 = vld [vmem:[#allocation2 + $0x38] sm:$0xff]
  %v304 = vld [vmem:[#allocation2 + $0x40] sm:$0xff]
  %v305 = vld [vmem:[#allocation2 + $0x48] sm:$0xff]
  %v306 = vld [vmem:[#allocation2 + $0x50] sm:$0xff]
  %v307 = vld [vmem:[#allocation2 + $0x58] sm:$0xff]
  %v308 = vld [vmem:[#allocation2 + $0x60] sm:$0xff]
  %v309 = vld [vmem:[#allocation2 + $0x68] sm:$0xff]
  %v310 = vld [vmem:[#allocation2 + $0x70] sm:$0xff]
  %v311 = vld [vmem:[#allocation2 + $0x78] sm:$0xff]
  %v312 = vld [vmem:[%s2] sm:$0xff]
  %v313 = vld [vmem:[%s2 + $0x8] sm:$0xff]
  %v314 = vld [vmem:[%s2 + $0x10] sm:$0xff]
  %v315 = vld [vmem:[%s2 + $0x18] sm:$0xff]
  %v316 = vld [vmem:[%s2 + $0x20] sm:$0xff]
  %v317 = vld [vmem:[%s2 + $0x28] sm:$0xff]
  %v318 = vld [vmem:[%s2 + $0x30] sm:$0xff]
  %v319 = vld [vmem:[%s2 + $0x38] sm:$0xff]
  %v320 = vld [vmem:[%s2 + $0x40] sm:$0xff]
  %v321 = vld [vmem:[%s2 + $0x48] sm:$0xff]
  %v322 = vld [vmem:[%s2 + $0x50] sm:$0xff]
  %v323 = vld [vmem:[%s2 + $0x58] sm:$0xff]
  %v324 = vld [vmem:[%s2 + $0x60] sm:$0xff]
  %v325 = vld [vmem:[%s2 + $0x68] sm:$0xff]
  %v326 = vld [vmem:[%s2 + $0x70] sm:$0xff]
  %v327 = vld [vmem:[%s2 + $0x78] sm:$0xff]
  %328 = vmatpush.msra.mxu0 %v327
  %329 = vmatpush.msra.mxu0 %v326
  %330 = vmatpush.msra.mxu0 %v325
  %331 = vmatpush.msra.mxu0 %v324
  %332 = vmatpush.msra.mxu0 %v323
  %333 = vmatpush.msra.mxu0 %v322
  %334 = vmatpush.msra.mxu0 %v321
  %335 = vmatpush.msra.mxu0 %v320
  %336 = vmatpush.msra.mxu0 %v319
  %337 = vmatpush.msra.mxu0 %v318
  %338 = vmatpush.msra.mxu0 %v317
  %339 = vmatpush.msra.mxu0 %v316
  %340 = vmatpush.msra.mxu0 %v315
  %341 = vmatpush.msra.mxu0 %v314
  %342 = vmatpush.msra.mxu0 %v313
  %343 = vmatpush.msra.mxu0 %v312
  %344 = vmatmul.f32.gmra.mxu0 %v280
  %v345 = vpop.f32.mrf.mxu0
  %v346 = vadd.f32 0.0, %v345
  %347 = vmatmul.f32.gmra.mxu0 %v281
  %v348 = vpop.f32.mrf.mxu0
  %v349 = vadd.f32 0.0, %v348
  %350 = vmatmul.f32.gmra.mxu0 %v282
  %v351 = vpop.f32.mrf.mxu0
  %v352 = vadd.f32 0.0, %v351
  %353 = vmatmul.f32.gmra.mxu0 %v283
  %v354 = vpop.f32.mrf.mxu0
  %v355 = vadd.f32 0.0, %v354
  %356 = vmatmul.f32.gmra.mxu0 %v284
  %v357 = vpop.f32.mrf.mxu0
  %v358 = vadd.f32 0.0, %v357
  %359 = vmatmul.f32.gmra.mxu0 %v285
  %v360 = vpop.f32.mrf.mxu0
  %v361 = vadd.f32 0.0, %v360
  %362 = vmatmul.f32.gmra.mxu0 %v286
  %v363 = vpop.f32.mrf.mxu0
  %v364 = vadd.f32 0.0, %v363
  %365 = vmatmul.f32.gmra.mxu0 %v287
  %v366 = vpop.f32.mrf.mxu0
  %v367 = vadd.f32 0.0, %v366
  %368 = vmatmul.f32.gmra.mxu0 %v288
  %v369 = vpop.f32.mrf.mxu0
  %v370 = vadd.f32 0.0, %v369
  %371 = vmatmul.f32.gmra.mxu0 %v289
  %v372 = vpop.f32.mrf.mxu0
  %v373 = vadd.f32 0.0, %v372
  %374 = vmatmul.f32.gmra.mxu0 %v290
  %v375 = vpop.f32.mrf.mxu0
  %v376 = vadd.f32 0.0, %v375
  %377 = vmatmul.f32.gmra.mxu0 %v291
  %v378 = vpop.f32.mrf.mxu0
  %v379 = vadd.f32 0.0, %v378
  %380 = vmatmul.f32.gmra.mxu0 %v292
  %v381 = vpop.f32.mrf.mxu0
  %v382 = vadd.f32 0.0, %v381
  %383 = vmatmul.f32.gmra.mxu0 %v293
  %v384 = vpop.f32.mrf.mxu0
  %v385 = vadd.f32 0.0, %v384
  %386 = vmatmul.f32.gmra.mxu0 %v294
  %v387 = vpop.f32.mrf.mxu0
  %v388 = vadd.f32 0.0, %v387
  %389 = vmatmul.f32.gmra.mxu0 %v295
  %v390 = vpop.f32.mrf.mxu0
  %v391 = vadd.f32 0.0, %v390
  %392 = vdwg.mxu0
  %v393 = vadd.f32 %v296, %v346
  %v394 = vadd.f32 %v297, %v349
  %v395 = vadd.f32 %v298, %v352
  %v396 = vadd.f32 %v299, %v355
  %v397 = vadd.f32 %v300, %v358
  %v398 = vadd.f32 %v301, %v361
  %v399 = vadd.f32 %v302, %v364
  %v400 = vadd.f32 %v303, %v367
  %v401 = vadd.f32 %v304, %v370
  %v402 = vadd.f32 %v305, %v373
  %v403 = vadd.f32 %v306, %v376
  %v404 = vadd.f32 %v307, %v379
  %v405 = vadd.f32 %v308, %v382
  %v406 = vadd.f32 %v309, %v385
  %v407 = vadd.f32 %v310, %v388
  %v408 = vadd.f32 %v311, %v391
  %vm409 = vcmask 261120
  %410 = vst.msk [vmem:[#allocation2] sm:$0xff] %vm409, %v393
  %411 = vst.msk [vmem:[#allocation2 + $0x8] sm:$0xff] %vm409, %v394
  %412 = vst.msk [vmem:[#allocation2 + $0x10] sm:$0xff] %vm409, %v395
  %413 = vst.msk [vmem:[#allocation2 + $0x18] sm:$0xff] %vm409, %v396
  %414 = vst.msk [vmem:[#allocation2 + $0x20] sm:$0xff] %vm409, %v397
  %415 = vst.msk [vmem:[#allocation2 + $0x28] sm:$0xff] %vm409, %v398
  %416 = vst.msk [vmem:[#allocation2 + $0x30] sm:$0xff] %vm409, %v399
  %417 = vst.msk [vmem:[#allocation2 + $0x38] sm:$0xff] %vm409, %v400
  %418 = vst.msk [vmem:[#allocation2 + $0x40] sm:$0xff] %vm409, %v401
  %419 = vst.msk [vmem:[#allocation2 + $0x48] sm:$0xff] %vm409, %v402
  %420 = vst.msk [vmem:[#allocation2 + $0x50] sm:$0xff] %vm409, %v403
  %421 = vst.msk [vmem:[#allocation2 + $0x58] sm:$0xff] %vm409, %v404
  %422 = vst.msk [vmem:[#allocation2 + $0x60] sm:$0xff] %vm409, %v405
  %423 = vst.msk [vmem:[#allocation2 + $0x68] sm:$0xff] %vm409, %v406
  %424 = vst.msk [vmem:[#allocation2 + $0x70] sm:$0xff] %vm409, %v407
  %425 = vst.msk [vmem:[#allocation2 + $0x78] sm:$0xff] %vm409, %v408
  // Predicated region
  $region18: #{tpu_custom_call.1} parent=0 // pred_check
    %p426 = pneg %p14
  $region19: #{tpu_custom_call.1} parent=0 // pred_check_branch
    %428 = sbr.rel (%p426) target = $region21
  $region20: #{tpu_custom_call.1} parent=0 // pred_region
    %v429 = vld [vmem:[#allocation2] sm:$0xff]
    %v430 = vld [vmem:[#allocation2 + $0x8] sm:$0xff]
    %v431 = vld [vmem:[#allocation2 + $0x10] sm:$0xff]
    %v432 = vld [vmem:[#allocation2 + $0x18] sm:$0xff]
    %v433 = vld [vmem:[#allocation2 + $0x20] sm:$0xff]
    %v434 = vld [vmem:[#allocation2 + $0x28] sm:$0xff]
    %v435 = vld [vmem:[#allocation2 + $0x30] sm:$0xff]
    %v436 = vld [vmem:[#allocation2 + $0x38] sm:$0xff]
    %v437 = vld [vmem:[#allocation2 + $0x40] sm:$0xff]
    %v438 = vld [vmem:[#allocation2 + $0x48] sm:$0xff]
    %v439 = vld [vmem:[#allocation2 + $0x50] sm:$0xff]
    %v440 = vld [vmem:[#allocation2 + $0x58] sm:$0xff]
    %v441 = vld [vmem:[#allocation2 + $0x60] sm:$0xff]
    %v442 = vld [vmem:[#allocation2 + $0x68] sm:$0xff]
    %v443 = vld [vmem:[#allocation2 + $0x70] sm:$0xff]
    %v444 = vld [vmem:[#allocation2 + $0x78] sm:$0xff]
    %445 = vst.msk [vmem:[%s3] sm:$0xff] %vm409, %v429
    %446 = vst.msk [vmem:[%s3 + $0x8] sm:$0xff] %vm409, %v430
    %447 = vst.msk [vmem:[%s3 + $0x10] sm:$0xff] %vm409, %v431
    %448 = vst.msk [vmem:[%s3 + $0x18] sm:$0xff] %vm409, %v432
    %449 = vst.msk [vmem:[%s3 + $0x20] sm:$0xff] %vm409, %v433
    %450 = vst.msk [vmem:[%s3 + $0x28] sm:$0xff] %vm409, %v434
    %451 = vst.msk [vmem:[%s3 + $0x30] sm:$0xff] %vm409, %v435
    %452 = vst.msk [vmem:[%s3 + $0x38] sm:$0xff] %vm409, %v436
    %453 = vst.msk [vmem:[%s3 + $0x40] sm:$0xff] %vm409, %v437
    %454 = vst.msk [vmem:[%s3 + $0x48] sm:$0xff] %vm409, %v438
    %455 = vst.msk [vmem:[%s3 + $0x50] sm:$0xff] %vm409, %v439
    %456 = vst.msk [vmem:[%s3 + $0x58] sm:$0xff] %vm409, %v440
    %457 = vst.msk [vmem:[%s3 + $0x60] sm:$0xff] %vm409, %v441
    %458 = vst.msk [vmem:[%s3 + $0x68] sm:$0xff] %vm409, %v442
    %459 = vst.msk [vmem:[%s3 + $0x70] sm:$0xff] %vm409, %v443
    %460 = vst.msk [vmem:[%s3 + $0x78] sm:$0xff] %vm409, %v444
  $region21: #{tpu_custom_call.1} parent=0 // pred_fallthru
    _
  // Predicated region
  $region22: #{tpu_custom_call.1} parent=0 // pred_check
    _
  $region23: #{tpu_custom_call.1} parent=0 // pred_check_branch
    %462 = sbr.rel (0) target = $region25
  $region24: #{tpu_custom_call.1} parent=0 // pred_region
    _
  $region25: #{tpu_custom_call.1} parent=0 // pred_fallthru
    _
  // Predicated region
  $region26: #{tpu_custom_call.1} parent=0 // pred_check
    _
  $region27: #{tpu_custom_call.1} parent=0 // pred_check_branch
    %464 = sbr.rel (0) target = $region29
  $region28: #{tpu_custom_call.1} parent=0 // pred_region
    _
  $region29: #{tpu_custom_call.1} parent=0 // pred_fallthru
    _

</llo_original>
